<compile_context>
chip_gen: v7x
topology: tpu7x:2x2x1
jax: 0.10.0
libtpu: 0.0.40
codegen_flags: <defaults>
</compile_context>

<pallas_src>
import functools

import jax
import jax.numpy as jnp
from jax.experimental import pallas as pl
from jax.experimental.pallas import tpu as pltpu


def _round_up(x, m):
    return (x + m - 1) // m * m


def _tpu_vmem_capacity_bytes():
    try:
        return int(pltpu.get_tpu_info().vmem_capacity_bytes)
    except Exception:
        return 64 * 1024 * 1024  # conservative fallback (v7x-sized)


def _budgets():
    """(working-set budget, vmem_limit_bytes, tq cap), generation-aware."""
    cap = _tpu_vmem_capacity_bytes()
    if cap >= 96 * 1024 * 1024:                      # 128 MiB parts: v5e / v6e
        return 96 * 1024 * 1024, 100 * 1024 * 1024, 512
    return 24 * 1024 * 1024, 40 * 1024 * 1024, 256   # 64 MiB parts: v7x


def _vmem_footprint(bt, tq, lk_p, d, dv_p, q_item, kv_item, out_item,
                    attn_item, mm_item, mask_last, cache_v):
    """Rough per-step VMEM bytes: double-buffered blocks + scratch + f32 temps."""
    q_b = bt * tq * d * q_item
    k_b = bt * lk_p * d * kv_item
    v_b = bt * lk_p * dv_p * kv_item
    out_b = bt * tq * dv_p * out_item
    attn_b = bt * tq * lk_p * attn_item
    mask_b = bt * tq * mask_last                      # bool bytes (upper bound)
    blocks = 2 * (q_b + k_b + v_b + out_b + attn_b + mask_b)
    scratch = bt * lk_p * d * mm_item + (bt * lk_p * dv_p * mm_item if cache_v else 0)
    temps = 4 * bt * (tq * d + lk_p * d + tq * dv_p) + 3 * 4 * bt * tq * lk_p
    return blocks + scratch + temps


def _pick_tq(lq, footprint_fn, budget, cap):
    cands = [t for t in range(min(lq, cap), 0, -1)
             if lq % t == 0 and (t == lq or t % 8 == 0)]
    if not cands:
        return lq
    for t in cands:
        if footprint_fn(1, t) <= budget:
            return t
    return cands[-1]


def _pick_bt(b, tq, footprint_fn, budget, cap=8):
    # Batch grouping is sacrificed before the query tile (tq feeds the MXU M dim).
    for bt in range(min(b, cap), 0, -1):
        if b % bt == 0 and footprint_fn(bt, tq) <= budget:
            return bt
    return 1


def _cosine_attn_kernel(*refs, has_mask, emit_attn, cache_v, matmul_dtype,
                        lk, lk_pad, approx_recip):
    it = iter(refs)
    q_ref = next(it)
    k_ref = next(it)
    v_ref = next(it)
    mask_ref = next(it) if has_mask else None
    out_ref = next(it)
    attn_ref = next(it) if emit_attn else None
    kn_ref = next(it)
    vc_ref = next(it) if cache_v else None

    eps = jnp.float32(1e-12)
    eps_sq = jnp.float32(1e-24)

    # Normalize K (and cast V) once per batch block.  The k/v blocks are resident
    # across query tiles (index_map ignores the query axis), so this hoists the
    # normalize / cast work out of the per-query-tile loop.
    @pl.when(pl.program_id(1) == 0)
    def _():
        kf = k_ref[...].astype(jnp.float32)
        k_scale = jax.lax.rsqrt(
            jnp.maximum(jnp.sum(kf * kf, axis=-1, keepdims=True), eps_sq))
        kn_ref[...] = (kf * k_scale).astype(kn_ref.dtype)
        if cache_v:
            vc_ref[...] = v_ref[...].astype(vc_ref.dtype)

    # Normalize Q: rsqrt(max(sumsq, eps^2)) == 1 / clamp(||q||, eps); fuse the
    # scale into the matmul-dtype cast.
    qf = q_ref[...].astype(jnp.float32)
    q_scale = jax.lax.rsqrt(
        jnp.maximum(jnp.sum(qf * qf, axis=-1, keepdims=True), eps_sq))
    q_mm = (qf * q_scale).astype(matmul_dtype)

    # Cosine-similarity scores + 1; contraction on the last dim, f32 accumulation.
    scores = jnp.einsum("bqd,bkd->bqk", q_mm, kn_ref[...],
                        preferred_element_type=jnp.float32) + 1.0

    if has_mask:
        scores = jnp.where(mask_ref[...], 0.0, scores)   # masked_fill(mask, 0.0)
    if lk_pad != lk:
        # Zero the padded key columns so they don't contribute to the row sum.
        col = jax.lax.broadcasted_iota(jnp.int32, (1, 1, lk_pad), 2)
        scores = jnp.where(col < lk, scores, 0.0)

    # Row-normalize with clamped denominator; reciprocal runs on the EUP.
    denom = jnp.maximum(jnp.sum(scores, axis=-1, keepdims=True), eps)
    attn = scores * pl.reciprocal(denom, approx=approx_recip)

    # TODO(synk): nn.Dropout(p=0.1) is identity in eval mode; a training-mode
    # version would apply pltpu.prng_seed / pltpu.prng_random_bits to `attn` here.

    v_mm = vc_ref[...] if cache_v else v_ref[...].astype(matmul_dtype)
    out = jnp.einsum("bqk,bkd->bqd", attn.astype(matmul_dtype), v_mm,
                     preferred_element_type=jnp.float32)

    out_ref[...] = out.astype(out_ref.dtype)
    if emit_attn:
        attn_ref[...] = attn.astype(attn_ref.dtype)


def cosine_sim_attention(q, k, v, mask=None, *,
                         matmul_dtype=jnp.bfloat16,
                         attn_dtype=jnp.bfloat16,
                         return_attn=True,
                         pad_to_lanes=True):
    """Cosine-similarity attention.

    q: (B, Lq, D), k: (B, Lk, D), v: (B, Lk, Dv).
    mask: bool, any shape broadcastable to (B, Lq, Lk), or None.
    matmul_dtype=jnp.bfloat16 uses the MXU fast path (f32 accumulation);
    pass jnp.float32 (and attn_dtype=jnp.float32) for f32-faithful numerics.
    Returns (out (B, Lq, Dv) in q.dtype, attn (B, Lq, Lk) in attn_dtype or None).
    """
    B, Lq, D = q.shape
    _, Lk, _ = k.shape
    Dv = v.shape[-1]
    has_mask = mask is not None
    emit_attn = bool(return_attn)
    mm_dtype = jnp.dtype(matmul_dtype)
    approx_recip = mm_dtype != jnp.dtype(jnp.float32)

    # Pad Lk / Dv up to lane width (128) so attn/out stores are lane-dense.
    lk_pad = _round_up(Lk, 128) if (pad_to_lanes and Lk % 128) else Lk
    dv_pad = _round_up(Dv, 128) if (pad_to_lanes and Dv % 128) else Dv
    if lk_pad != Lk:
        k = jnp.pad(k, ((0, 0), (0, lk_pad - Lk), (0, 0)))
    if lk_pad != Lk or dv_pad != Dv:
        v = jnp.pad(v, ((0, 0), (0, lk_pad - Lk), (0, dv_pad - Dv)))
    cache_v = jnp.dtype(v.dtype) != mm_dtype

    # Mask stays in its natural (broadcastable) shape — no materialized broadcast.
    mask_last = 0
    if has_mask:
        mask = jnp.asarray(mask)
        if mask.dtype != jnp.bool_:
            mask = mask.astype(jnp.bool_)
        while mask.ndim < 3:
            mask = mask[None]
        mb, mq_, mk = mask.shape
        if mb not in (1, B) or mq_ not in (1, Lq) or mk not in (1, Lk):
            raise ValueError(f"mask shape {mask.shape} not broadcastable to {(B, Lq, Lk)}")
        if mk == Lk and lk_pad != Lk:
            mask = jnp.pad(mask, ((0, 0), (0, 0), (0, lk_pad - Lk)))  # pads False
        mask_last = mask.shape[2]

    budget, vmem_limit, tq_cap = _budgets()
    q_item = jnp.dtype(q.dtype).itemsize
    kv_item = jnp.dtype(k.dtype).itemsize
    out_item = q_item
    attn_item = jnp.dtype(attn_dtype).itemsize if emit_attn else 0

    def fp(bt, tq):
        return _vmem_footprint(bt, tq, lk_pad, D, dv_pad, q_item, kv_item,
                               out_item, attn_item, mm_dtype.itemsize,
                               mask_last, cache_v)

    tq = _pick_tq(Lq, fp, budget, tq_cap)
    bt = _pick_bt(B, tq, fp, budget)
    grid = (B // bt, Lq // tq)

    in_specs = [
        pl.BlockSpec((bt, tq, D), lambda b, i: (b, i, 0)),
        pl.BlockSpec((bt, lk_pad, D), lambda b, i: (b, 0, 0)),       # resident over q tiles
        pl.BlockSpec((bt, lk_pad, dv_pad), lambda b, i: (b, 0, 0)),  # resident over q tiles
    ]
    inputs = [q, k, v]
    if has_mask:
        mb, mq_, _ = mask.shape
        mblock = (bt if mb == B else 1, tq if mq_ == Lq else 1, mask.shape[2])
        in_specs.append(pl.BlockSpec(
            mblock,
            lambda b, i, _b=(mb == B), _q=(mq_ == Lq): (b if _b else 0, i if _q else 0, 0)))
        inputs.append(mask)

    out_specs = [pl.BlockSpec((bt, tq, dv_pad), lambda b, i: (b, i, 0))]
    out_shape = [jax.ShapeDtypeStruct((B, Lq, dv_pad), q.dtype)]
    if emit_attn:
        out_specs.append(pl.BlockSpec((bt, tq, lk_pad), lambda b, i: (b, i, 0)))
        out_shape.append(jax.ShapeDtypeStruct((B, Lq, lk_pad), attn_dtype))

    scratch_shapes = [pltpu.VMEM((bt, lk_pad, D), mm_dtype)]
    if cache_v:
        scratch_shapes.append(pltpu.VMEM((bt, lk_pad, dv_pad), mm_dtype))

    kernel = functools.partial(
        _cosine_attn_kernel, has_mask=has_mask, emit_attn=emit_attn,
        cache_v=cache_v, matmul_dtype=mm_dtype, lk=Lk, lk_pad=lk_pad,
        approx_recip=approx_recip)

    results = pl.pallas_call(
        kernel,
        out_shape=tuple(out_shape),
        grid_spec=pltpu.PrefetchScalarGridSpec(
            num_scalar_prefetch=0,
            grid=grid,
            in_specs=in_specs,
            out_specs=out_specs,
            scratch_shapes=scratch_shapes,
        ),
        compiler_params=pltpu.CompilerParams(
            # Batch axis is split across cores; the query axis is sequential per
            # core so the scratch cache written at the first query tile stays
            # valid for the rest of the batch block.
            dimension_semantics=("parallel", "arbitrary"),
            vmem_limit_bytes=vmem_limit,
        ),
    )(*inputs)

    if emit_attn:
        out, attn_out = results
    else:
        (out,) = results
        attn_out = None

    if dv_pad != Dv:
        out = out[:, :, :Dv]
    if emit_attn and lk_pad != Lk:
        attn_out = attn_out[:, :, :Lk]
    return out, attn_out


def _reference(q, k, v, mask=None):
    eps = 1e-12
    q_n = q / jnp.maximum(jnp.linalg.norm(q, axis=2, keepdims=True), eps)
    k_n = k / jnp.maximum(jnp.linalg.norm(k, axis=2, keepdims=True), eps)
    attn = jnp.einsum("bqd,bkd->bqk", q_n, k_n) + 1.0
    if mask is not None:
        attn = jnp.where(mask, 0.0, attn)
    attn = attn / jnp.maximum(jnp.sum(attn, axis=2, keepdims=True), eps)
    out = jnp.einsum("bqk,bkd->bqd", attn, v)
    return out, attn


if __name__ == "__main__":
    key = jax.random.PRNGKey(0)
    kq, kk, kv = jax.random.split(key, 3)

    B, Lq, Lk, D, Dv = 2, 8, 8, 32, 32
    q = jax.random.normal(kq, (B, Lq, D), dtype=jnp.float32)
    k = jax.random.normal(kk, (B, Lk, D), dtype=jnp.float32)
    v = jax.random.normal(kv, (B, Lk, Dv), dtype=jnp.float32)
    # Natural (un-broadcast) causal mask — the wrapper never materializes (B,Lq,Lk).
    mask2d = jnp.triu(jnp.ones((Lq, Lk), dtype=jnp.bool_), k=1)
    mask_full = jnp.broadcast_to(mask2d, (B, Lq, Lk))

    out_ref_, attn_ref_ = _reference(q, k, v)
    out_ref_m, attn_ref_m = _reference(q, k, v, mask_full)

    # Exact f32 path, no mask.
    out, attn = cosine_sim_attention(q, k, v, mask=None,
                                     matmul_dtype=jnp.float32,
                                     attn_dtype=jnp.float32)
    jax.block_until_ready(out)
    assert jnp.allclose(out, out_ref_, atol=1e-5, rtol=1e-5)
    assert jnp.allclose(attn, attn_ref_, atol=1e-5, rtol=1e-5)

    # Exact f32 path, with (un-broadcast) mask.
    out_m, attn_m = cosine_sim_attention(q, k, v, mask=mask2d,
                                         matmul_dtype=jnp.float32,
                                         attn_dtype=jnp.float32)
    jax.block_until_ready(out_m)
    assert jnp.allclose(out_m, out_ref_m, atol=1e-5, rtol=1e-5)
    assert jnp.allclose(attn_m, attn_ref_m, atol=1e-5, rtol=1e-5)

    # Default fast path: bf16 MXU operands (f32 accumulation) + bf16 attn output.
    out_b, attn_b = cosine_sim_attention(q, k, v, mask=mask2d)
    jax.block_until_ready(out_b)
    assert jnp.allclose(out_b, out_ref_m, atol=3e-2, rtol=3e-2)
    assert jnp.allclose(attn_b.astype(jnp.float32), attn_ref_m, atol=3e-2, rtol=3e-2)

    # Output-only path (skips the dominant attn writeback entirely).
    out_o, attn_o = cosine_sim_attention(q, k, v, mask=mask2d, return_attn=False)
    jax.block_until_ready(out_o)
    assert attn_o is None
    assert jnp.allclose(out_o, out_ref_m, atol=3e-2, rtol=3e-2)

    print("KERNEL_OK")
</pallas_src>

<mosaic_0001>
module attributes {stable_mosaic.version = 11 : i64} {
  func.func @_cosine_attn_kernel(%arg0: i32, %arg1: i32, %arg2: memref<2x8x32xf32, #tpu.memory_space<vmem>>, %arg3: memref<2x128x32xf32, #tpu.memory_space<vmem>>, %arg4: memref<2x128x128xf32, #tpu.memory_space<vmem>>, %arg5: memref<2x8x128xf32, #tpu.memory_space<vmem>>, %arg6: memref<2x8x128xf32, #tpu.memory_space<vmem>>, %arg7: memref<2x128x32xf32, #tpu.memory_space<vmem>>) attributes {dimension_semantics = [#tpu.dimension_semantics<parallel>, #tpu.dimension_semantics<arbitrary>], iteration_bounds = array<i64: 1, 1>, scalar_prefetch = 0 : i64, scratch_operands = 1 : i64, tpu.core_type = #tpu.core_type<tc>, window_params = [{transform_indices = @transform_0, window_bounds = array<i64: 2, 8, 32>}, {transform_indices = @transform_1, window_bounds = array<i64: 2, 128, 32>}, {transform_indices = @transform_2, window_bounds = array<i64: 2, 128, 128>}, {transform_indices = @transform_3, window_bounds = array<i64: 2, 8, 128>}, {transform_indices = @transform_4, window_bounds = array<i64: 2, 8, 128>}]} {
    %c0_i32 = arith.constant 0 : i32
    %0 = arith.cmpi eq, %arg1, %c0_i32 : i32
    %1 = arith.extui %0 : i1 to i32
    %cst = arith.constant 1.000000e-24 : f32
    %c0_i32_0 = arith.constant 0 : i32
    %2 = arith.cmpi ne, %1, %c0_i32_0 : i32
    scf.if %2 {
      %c0_23 = arith.constant 0 : index
      %c0_24 = arith.constant 0 : index
      %c0_25 = arith.constant 0 : index
      %34 = vector.load %arg3[%c0_23, %c0_24, %c0_25] : memref<2x128x32xf32, #tpu.memory_space<vmem>>, vector<2x128x32xf32>
      %35 = arith.mulf %34, %34 : vector<2x128x32xf32>
      %cst_26 = arith.constant dense<0.000000e+00> : vector<2x128xf32>
      %36 = vector.multi_reduction <add>, %35, %cst_26 [2] : vector<2x128x32xf32> to vector<2x128xf32>
      %37 = vector.shape_cast %36 : vector<2x128xf32> to vector<2x128x1xf32>
      %38 = vector.broadcast %cst : f32 to vector<2x128x1xf32>
      %39 = arith.maximumf %37, %38 : vector<2x128x1xf32>
      %40 = math.rsqrt %39 : vector<2x128x1xf32>
      %41 = vector.broadcast %40 : vector<2x128x1xf32> to vector<2x128x32xf32>
      %42 = arith.mulf %34, %41 : vector<2x128x32xf32>
      %c0_27 = arith.constant 0 : index
      %c0_28 = arith.constant 0 : index
      %c0_29 = arith.constant 0 : index
      %43 = vector.load %arg7[%c0_27, %c0_28, %c0_29] : memref<2x128x32xf32, #tpu.memory_space<vmem>>, vector<2x128x32xf32>
      tpu.vector_store %arg7[%c0_27, %c0_28, %c0_29], %42 {strides = array<i32>} : memref<2x128x32xf32, #tpu.memory_space<vmem>>, vector<2x128x32xf32>,
    } else {
    }
    %c0 = arith.constant 0 : index
    %c0_1 = arith.constant 0 : index
    %c0_2 = arith.constant 0 : index
    %3 = vector.load %arg2[%c0, %c0_1, %c0_2] : memref<2x8x32xf32, #tpu.memory_space<vmem>>, vector<2x8x32xf32>
    %4 = arith.mulf %3, %3 : vector<2x8x32xf32>
    %cst_3 = arith.constant dense<0.000000e+00> : vector<2x8xf32>
    %5 = vector.multi_reduction <add>, %4, %cst_3 [2] : vector<2x8x32xf32> to vector<2x8xf32>
    %6 = vector.shape_cast %5 : vector<2x8xf32> to vector<2x8x1xf32>
    %cst_4 = arith.constant 1.000000e-24 : f32
    %7 = vector.broadcast %cst_4 : f32 to vector<2x8x1xf32>
    %8 = arith.maximumf %6, %7 : vector<2x8x1xf32>
    %9 = math.rsqrt %8 : vector<2x8x1xf32>
    %10 = vector.broadcast %9 : vector<2x8x1xf32> to vector<2x8x32xf32>
    %11 = arith.mulf %3, %10 : vector<2x8x32xf32>
    %c0_5 = arith.constant 0 : index
    %c0_6 = arith.constant 0 : index
    %c0_7 = arith.constant 0 : index
    %12 = vector.load %arg7[%c0_5, %c0_6, %c0_7] : memref<2x128x32xf32, #tpu.memory_space<vmem>>, vector<2x128x32xf32>
    "tpu.trace_start"() <{level = 10 : i32, message = "bqd,bkd->bqk"}> : () -> ()
    %cst_8 = arith.constant dense<0.000000e+00> : vector<2x8x128xf32>
    %13 = tpu.matmul %11, %12, %cst_8 {dimension_numbers = #tpu.dot_dimension_numbers<[2], [2], [1], [1], [0, 0, 0, 1, 1, 1], [0], [0]>} : vector<2x8x32xf32>, vector<2x128x32xf32>, vector<2x8x128xf32> -> vector<2x8x128xf32>
    "tpu.trace_stop"() : () -> ()
    %cst_9 = arith.constant 1.000000e+00 : f32
    %14 = vector.broadcast %cst_9 : f32 to vector<2x8x128xf32>
    %15 = arith.addf %13, %14 : vector<2x8x128xf32>
    %16 = tpu.iota {dimensions = array<i32: 2>} : vector<1x1x128xi32>
    %c8_i32 = arith.constant 8 : i32
    %17 = vector.broadcast %c8_i32 : i32 to vector<1x1x128xi32>
    %18 = arith.cmpi slt, %16, %17 : vector<1x1x128xi32>
    %cst_10 = arith.constant 0.000000e+00 : f32
    %19 = vector.shape_cast %18 : vector<1x1x128xi1> to vector<1x1x128xi1>
    %20 = vector.broadcast %19 : vector<1x1x128xi1> to vector<2x8x128xi1>
    %21 = vector.broadcast %cst_10 : f32 to vector<2x8x128xf32>
    %22 = arith.select %20, %15, %21 : vector<2x8x128xi1>, vector<2x8x128xf32>
    %cst_11 = arith.constant dense<0.000000e+00> : vector<2x8xf32>
    %23 = vector.multi_reduction <add>, %22, %cst_11 [2] : vector<2x8x128xf32> to vector<2x8xf32>
    %24 = vector.shape_cast %23 : vector<2x8xf32> to vector<2x8x1xf32>
    %cst_12 = arith.constant 9.99999996E-13 : f32
    %25 = vector.broadcast %cst_12 : f32 to vector<2x8x1xf32>
    %26 = arith.maximumf %24, %25 : vector<2x8x1xf32>
    %27 = tpu.reciprocal %26 : vector<2x8x1xf32> -> vector<2x8x1xf32>
    %28 = vector.broadcast %27 : vector<2x8x1xf32> to vector<2x8x128xf32>
    %29 = arith.mulf %22, %28 : vector<2x8x128xf32>
    %c0_13 = arith.constant 0 : index
    %c0_14 = arith.constant 0 : index
    %c0_15 = arith.constant 0 : index
    %30 = vector.load %arg4[%c0_13, %c0_14, %c0_15] : memref<2x128x128xf32, #tpu.memory_space<vmem>>, vector<2x128x128xf32>
    "tpu.trace_start"() <{level = 10 : i32, message = "bqk,bkd->bqd"}> : () -> ()
    %cst_16 = arith.constant dense<0.000000e+00> : vector<2x8x128xf32>
    %31 = tpu.matmul %29, %30, %cst_16 {dimension_numbers = #tpu.dot_dimension_numbers<[2], [1], [1], [2], [0, 0, 0, 1, 1, 2], [0], [0]>} : vector<2x8x128xf32>, vector<2x128x128xf32>, vector<2x8x128xf32> -> vector<2x8x128xf32>
    "tpu.trace_stop"() : () -> ()
    %c0_17 = arith.constant 0 : index
    %c0_18 = arith.constant 0 : index
    %c0_19 = arith.constant 0 : index
    %32 = vector.load %arg5[%c0_17, %c0_18, %c0_19] : memref<2x8x128xf32, #tpu.memory_space<vmem>>, vector<2x8x128xf32>
    tpu.vector_store %arg5[%c0_17, %c0_18, %c0_19], %31 {strides = array<i32>} : memref<2x8x128xf32, #tpu.memory_space<vmem>>, vector<2x8x128xf32>,
    %c0_20 = arith.constant 0 : index
    %c0_21 = arith.constant 0 : index
    %c0_22 = arith.constant 0 : index
    %33 = vector.load %arg6[%c0_20, %c0_21, %c0_22] : memref<2x8x128xf32, #tpu.memory_space<vmem>>, vector<2x8x128xf32>
    tpu.vector_store %arg6[%c0_20, %c0_21, %c0_22], %29 {strides = array<i32>} : memref<2x8x128xf32, #tpu.memory_space<vmem>>, vector<2x8x128xf32>,
    return
  }
  func.func @transform_0(%arg0: i32, %arg1: i32) -> (i32, i32, i32) {
    %c0_i32 = arith.constant 0 : i32
    %c0_i32_0 = arith.constant 0 : i32
    return %arg0, %arg1, %c0_i32 : i32, i32, i32
  }
  func.func @transform_1(%arg0: i32, %arg1: i32) -> (i32, i32, i32) {
    %c0_i32 = arith.constant 0 : i32
    %c0_i32_0 = arith.constant 0 : i32
    %c0_i32_1 = arith.constant 0 : i32
    return %arg0, %c0_i32, %c0_i32_0 : i32, i32, i32
  }
  func.func @transform_2(%arg0: i32, %arg1: i32) -> (i32, i32, i32) {
    %c0_i32 = arith.constant 0 : i32
    %c0_i32_0 = arith.constant 0 : i32
    %c0_i32_1 = arith.constant 0 : i32
    return %arg0, %c0_i32, %c0_i32_0 : i32, i32, i32
  }
  func.func @transform_3(%arg0: i32, %arg1: i32) -> (i32, i32, i32) {
    %c0_i32 = arith.constant 0 : i32
    %c0_i32_0 = arith.constant 0 : i32
    return %arg0, %arg1, %c0_i32 : i32, i32, i32
  }
  func.func @transform_4(%arg0: i32, %arg1: i32) -> (i32, i32, i32) {
    %c0_i32 = arith.constant 0 : i32
    %c0_i32_0 = arith.constant 0 : i32
    return %arg0, %arg1, %c0_i32 : i32, i32, i32
  }
}

</mosaic_0001>

<llo_original>
// kernel: tpu_custom_call.1
$region0: #{tpu_custom_call.1}
  #allocation0 [shape = 'u32[]', space=smem, size = 0x4, offset = 0x4, fixed_abs, tag = 'smem constant byte address 0x4 - core index']
  #allocation1 [shape = 'u32[144,128]{1,0:T(1,128)}', space=vmem, size = 0x12000, scoped, tag = 'internal scratch']
  #allocation2 [shape = 'f32[2,128,32]{2,1,0:T(8,128)}', space=vmem, size = 0x20000, scoped, tag = 'scratch operand']
  %s0 = inlined_call_operand.vmem [shape: f32[2,8,32], index: 0, kind: input, shape index: {}]
  %s1 = inlined_call_operand.vmem [shape: f32[2,128,32], index: 1, kind: input, shape index: {}]
  %s2 = inlined_call_operand.vmem [shape: f32[2,128,128], index: 2, kind: input, shape index: {}]
  %s3 = inlined_call_operand.hbm [shape: f32[2,8,128], index: 3, kind: output, shape index: {0}]
  %s4 = inlined_call_operand.hbm [shape: f32[2,8,128], index: 4, kind: output, shape index: {1}]
  %5 = xla_tuple %s3, %s4
  %s6 = sld [smem:[#allocation0]]
  $region34: #{tpu_custom_call.1} parent=0
    _
  %s8 = ssub.s32 1, %s6
  %s9 = scalar_select 0, %s8, %s6
  $region1: #{tpu_custom_call.1} parent=0
    #allocation3 [shape = 'u8[8192]{0}', space=vmem, size = 0x2000, scoped, tag = 'output window, operand 0, single buffered']
    #allocation4 [shape = 's32[1]{0}', space=sflag, size = 0x4, scoped, tag = 'scoped memory for tpu_custom_call.1']
    #allocation5 [shape = 'u8[8192]{0}', space=vmem, size = 0x2000, scoped, tag = 'output window, operand 1, single buffered']
    #allocation6 [shape = 's32[1]{0}', space=sflag, size = 0x4, scoped, tag = 'scoped memory for tpu_custom_call.1']
    %10 = vsyncpa [#allocation4], 0
    %11 = vsyncpa [#allocation6], 0
    // Predicated region
    $region2: #{tpu_custom_call.1} parent=1 // pred_check
      _
    $region3: #{tpu_custom_call.1} parent=1 // pred_check_branch
      %13 = sbr.rel (0) target = $region5
    $region4: #{tpu_custom_call.1} parent=1 // pred_region
      _
    $region5: #{tpu_custom_call.1} parent=1 // pred_fallthru
      _
    // Predicated region
    $region6: #{tpu_custom_call.1} parent=1 // pred_check
      _
    $region7: #{tpu_custom_call.1} parent=1 // pred_check_branch
      %15 = sbr.rel (0) target = $region9
    $region8: #{tpu_custom_call.1} parent=1 // pred_region
      _
    $region9: #{tpu_custom_call.1} parent=1 // pred_fallthru
      _
    // Predicated region
    $region10: #{tpu_custom_call.1} parent=1 // pred_check
      _
    $region11: #{tpu_custom_call.1} parent=1 // pred_check_branch
      %17 = sbr.rel (0) target = $region13
    $region12: #{tpu_custom_call.1} parent=1 // pred_region
      _
    $region13: #{tpu_custom_call.1} parent=1 // pred_fallthru
      _
    %p18 = scmp.eq.s32.totalorder 0, 0
    // Predicated region
    $region14: #{tpu_custom_call.1} parent=1 // pred_check
      %p19 = pneg %p18
    $region15: #{tpu_custom_call.1} parent=1 // pred_check_branch
      %21 = sbr.rel (%p19) target = $region17
    $region16: #{tpu_custom_call.1} parent=1 // pred_region
      %v22 = vld [vmem:[%s1] sm:$0xff]
      %v23 = vld [vmem:[%s1 + $0x8] sm:$0xff]
      %v24 = vld [vmem:[%s1 + $0x10] sm:$0xff]
      %v25 = vld [vmem:[%s1 + $0x18] sm:$0xff]
      %v26 = vld [vmem:[%s1 + $0x20] sm:$0xff]
      %v27 = vld [vmem:[%s1 + $0x28] sm:$0xff]
      %v28 = vld [vmem:[%s1 + $0x30] sm:$0xff]
      %v29 = vld [vmem:[%s1 + $0x38] sm:$0xff]
      %v30 = vld [vmem:[%s1 + $0x40] sm:$0xff]
      %v31 = vld [vmem:[%s1 + $0x48] sm:$0xff]
      %v32 = vld [vmem:[%s1 + $0x50] sm:$0xff]
      %v33 = vld [vmem:[%s1 + $0x58] sm:$0xff]
      %v34 = vld [vmem:[%s1 + $0x60] sm:$0xff]
      %v35 = vld [vmem:[%s1 + $0x68] sm:$0xff]
      %v36 = vld [vmem:[%s1 + $0x70] sm:$0xff]
      %v37 = vld [vmem:[%s1 + $0x78] sm:$0xff]
      %v38 = vld [vmem:[%s1 + $0x80] sm:$0xff]
      %v39 = vld [vmem:[%s1 + $0x88] sm:$0xff]
      %v40 = vld [vmem:[%s1 + $0x90] sm:$0xff]
      %v41 = vld [vmem:[%s1 + $0x98] sm:$0xff]
      %v42 = vld [vmem:[%s1 + $0xa0] sm:$0xff]
      %v43 = vld [vmem:[%s1 + $0xa8] sm:$0xff]
      %v44 = vld [vmem:[%s1 + $0xb0] sm:$0xff]
      %v45 = vld [vmem:[%s1 + $0xb8] sm:$0xff]
      %v46 = vld [vmem:[%s1 + $0xc0] sm:$0xff]
      %v47 = vld [vmem:[%s1 + $0xc8] sm:$0xff]
      %v48 = vld [vmem:[%s1 + $0xd0] sm:$0xff]
      %v49 = vld [vmem:[%s1 + $0xd8] sm:$0xff]
      %v50 = vld [vmem:[%s1 + $0xe0] sm:$0xff]
      %v51 = vld [vmem:[%s1 + $0xe8] sm:$0xff]
      %v52 = vld [vmem:[%s1 + $0xf0] sm:$0xff]
      %v53 = vld [vmem:[%s1 + $0xf8] sm:$0xff]
      %v54 = vmul.f32 %v22, %v22
      %v55 = vmul.f32 %v23, %v23
      %v56 = vmul.f32 %v24, %v24
      %v57 = vmul.f32 %v25, %v25
      %v58 = vmul.f32 %v26, %v26
      %v59 = vmul.f32 %v27, %v27
      %v60 = vmul.f32 %v28, %v28
      %v61 = vmul.f32 %v29, %v29
      %v62 = vmul.f32 %v30, %v30
      %v63 = vmul.f32 %v31, %v31
      %v64 = vmul.f32 %v32, %v32
      %v65 = vmul.f32 %v33, %v33
      %v66 = vmul.f32 %v34, %v34
      %v67 = vmul.f32 %v35, %v35
      %v68 = vmul.f32 %v36, %v36
      %v69 = vmul.f32 %v37, %v37
      %v70 = vmul.f32 %v38, %v38
      %v71 = vmul.f32 %v39, %v39
      %v72 = vmul.f32 %v40, %v40
      %v73 = vmul.f32 %v41, %v41
      %v74 = vmul.f32 %v42, %v42
      %v75 = vmul.f32 %v43, %v43
      %v76 = vmul.f32 %v44, %v44
      %v77 = vmul.f32 %v45, %v45
      %v78 = vmul.f32 %v46, %v46
      %v79 = vmul.f32 %v47, %v47
      %v80 = vmul.f32 %v48, %v48
      %v81 = vmul.f32 %v49, %v49
      %v82 = vmul.f32 %v50, %v50
      %v83 = vmul.f32 %v51, %v51
      %v84 = vmul.f32 %v52, %v52
      %v85 = vmul.f32 %v53, %v53
      %vm86 = vcmask 261120
      %v87 = vsel %vm86, %v54, 0.0
      %88 = vadd.xlane.f32.xlu0 %v87
      %v89 = vpop.xlane.xlu0 %88
      %v90 = vsel %vm86, %v55, 0.0
      %91 = vadd.xlane.f32.xlu0 %v90
      %v92 = vpop.xlane.xlu0 %91
      %v93 = vsel %vm86, %v56, 0.0
      %94 = vadd.xlane.f32.xlu0 %v93
      %v95 = vpop.xlane.xlu0 %94
      %v96 = vsel %vm86, %v57, 0.0
      %97 = vadd.xlane.f32.xlu0 %v96
      %v98 = vpop.xlane.xlu0 %97
      %v99 = vsel %vm86, %v58, 0.0
      %100 = vadd.xlane.f32.xlu0 %v99
      %v101 = vpop.xlane.xlu0 %100
      %v102 = vsel %vm86, %v59, 0.0
      %103 = vadd.xlane.f32.xlu0 %v102
      %v104 = vpop.xlane.xlu0 %103
      %v105 = vsel %vm86, %v60, 0.0
      %106 = vadd.xlane.f32.xlu0 %v105
      %v107 = vpop.xlane.xlu0 %106
      %v108 = vsel %vm86, %v61, 0.0
      %109 = vadd.xlane.f32.xlu0 %v108
      %v110 = vpop.xlane.xlu0 %109
      %v111 = vsel %vm86, %v62, 0.0
      %112 = vadd.xlane.f32.xlu0 %v111
      %v113 = vpop.xlane.xlu0 %112
      %v114 = vsel %vm86, %v63, 0.0
      %115 = vadd.xlane.f32.xlu0 %v114
      %v116 = vpop.xlane.xlu0 %115
      %v117 = vsel %vm86, %v64, 0.0
      %118 = vadd.xlane.f32.xlu0 %v117
      %v119 = vpop.xlane.xlu0 %118
      %v120 = vsel %vm86, %v65, 0.0
      %121 = vadd.xlane.f32.xlu0 %v120
      %v122 = vpop.xlane.xlu0 %121
      %v123 = vsel %vm86, %v66, 0.0
      %124 = vadd.xlane.f32.xlu0 %v123
      %v125 = vpop.xlane.xlu0 %124
      %v126 = vsel %vm86, %v67, 0.0
      %127 = vadd.xlane.f32.xlu0 %v126
      %v128 = vpop.xlane.xlu0 %127
      %v129 = vsel %vm86, %v68, 0.0
      %130 = vadd.xlane.f32.xlu0 %v129
      %v131 = vpop.xlane.xlu0 %130
      %v132 = vsel %vm86, %v69, 0.0
      %133 = vadd.xlane.f32.xlu0 %v132
      %v134 = vpop.xlane.xlu0 %133
      %v135 = vsel %vm86, %v70, 0.0
      %136 = vadd.xlane.f32.xlu0 %v135
      %v137 = vpop.xlane.xlu0 %136
      %v138 = vsel %vm86, %v71, 0.0
      %139 = vadd.xlane.f32.xlu0 %v138
      %v140 = vpop.xlane.xlu0 %139
      %v141 = vsel %vm86, %v72, 0.0
      %142 = vadd.xlane.f32.xlu0 %v141
      %v143 = vpop.xlane.xlu0 %142
      %v144 = vsel %vm86, %v73, 0.0
      %145 = vadd.xlane.f32.xlu0 %v144
      %v146 = vpop.xlane.xlu0 %145
      %v147 = vsel %vm86, %v74, 0.0
      %148 = vadd.xlane.f32.xlu0 %v147
      %v149 = vpop.xlane.xlu0 %148
      %v150 = vsel %vm86, %v75, 0.0
      %151 = vadd.xlane.f32.xlu0 %v150
      %v152 = vpop.xlane.xlu0 %151
      %v153 = vsel %vm86, %v76, 0.0
      %154 = vadd.xlane.f32.xlu0 %v153
      %v155 = vpop.xlane.xlu0 %154
      %v156 = vsel %vm86, %v77, 0.0
      %157 = vadd.xlane.f32.xlu0 %v156
      %v158 = vpop.xlane.xlu0 %157
      %v159 = vsel %vm86, %v78, 0.0
      %160 = vadd.xlane.f32.xlu0 %v159
      %v161 = vpop.xlane.xlu0 %160
      %v162 = vsel %vm86, %v79, 0.0
      %163 = vadd.xlane.f32.xlu0 %v162
      %v164 = vpop.xlane.xlu0 %163
      %v165 = vsel %vm86, %v80, 0.0
      %166 = vadd.xlane.f32.xlu0 %v165
      %v167 = vpop.xlane.xlu0 %166
      %v168 = vsel %vm86, %v81, 0.0
      %169 = vadd.xlane.f32.xlu0 %v168
      %v170 = vpop.xlane.xlu0 %169
      %v171 = vsel %vm86, %v82, 0.0
      %172 = vadd.xlane.f32.xlu0 %v171
      %v173 = vpop.xlane.xlu0 %172
      %v174 = vsel %vm86, %v83, 0.0
      %175 = vadd.xlane.f32.xlu0 %v174
      %v176 = vpop.xlane.xlu0 %175
      %v177 = vsel %vm86, %v84, 0.0
      %178 = vadd.xlane.f32.xlu0 %v177
      %v179 = vpop.xlane.xlu0 %178
      %v180 = vsel %vm86, %v85, 0.0
      %181 = vadd.xlane.f32.xlu0 %v180
      %v182 = vpop.xlane.xlu0 %181
      %v183 = vmax.f32 %v89, 1e-24
      %v184 = vmax.f32 %v92, 1e-24
      %v185 = vmax.f32 %v95, 1e-24
      %v186 = vmax.f32 %v98, 1e-24
      %v187 = vmax.f32 %v101, 1e-24
      %v188 = vmax.f32 %v104, 1e-24
      %v189 = vmax.f32 %v107, 1e-24
      %v190 = vmax.f32 %v110, 1e-24
      %v191 = vmax.f32 %v113, 1e-24
      %v192 = vmax.f32 %v116, 1e-24
      %v193 = vmax.f32 %v119, 1e-24
      %v194 = vmax.f32 %v122, 1e-24
      %v195 = vmax.f32 %v125, 1e-24
      %v196 = vmax.f32 %v128, 1e-24
      %v197 = vmax.f32 %v131, 1e-24
      %v198 = vmax.f32 %v134, 1e-24
      %v199 = vmax.f32 %v137, 1e-24
      %v200 = vmax.f32 %v140, 1e-24
      %v201 = vmax.f32 %v143, 1e-24
      %v202 = vmax.f32 %v146, 1e-24
      %v203 = vmax.f32 %v149, 1e-24
      %v204 = vmax.f32 %v152, 1e-24
      %v205 = vmax.f32 %v155, 1e-24
      %v206 = vmax.f32 %v158, 1e-24
      %v207 = vmax.f32 %v161, 1e-24
      %v208 = vmax.f32 %v164, 1e-24
      %v209 = vmax.f32 %v167, 1e-24
      %v210 = vmax.f32 %v170, 1e-24
      %v211 = vmax.f32 %v173, 1e-24
      %v212 = vmax.f32 %v176, 1e-24
      %v213 = vmax.f32 %v179, 1e-24
      %v214 = vmax.f32 %v182, 1e-24
      %v215 = vrsqrt.pop %v183
      %v216 = vrsqrt.pop %v184
      %v217 = vrsqrt.pop %v185
      %v218 = vrsqrt.pop %v186
      %v219 = vrsqrt.pop %v187
      %v220 = vrsqrt.pop %v188
      %v221 = vrsqrt.pop %v189
      %v222 = vrsqrt.pop %v190
      %v223 = vrsqrt.pop %v191
      %v224 = vrsqrt.pop %v192
      %v225 = vrsqrt.pop %v193
      %v226 = vrsqrt.pop %v194
      %v227 = vrsqrt.pop %v195
      %v228 = vrsqrt.pop %v196
      %v229 = vrsqrt.pop %v197
      %v230 = vrsqrt.pop %v198
      %v231 = vrsqrt.pop %v199
      %v232 = vrsqrt.pop %v200
      %v233 = vrsqrt.pop %v201
      %v234 = vrsqrt.pop %v202
      %v235 = vrsqrt.pop %v203
      %v236 = vrsqrt.pop %v204
      %v237 = vrsqrt.pop %v205
      %v238 = vrsqrt.pop %v206
      %v239 = vrsqrt.pop %v207
      %v240 = vrsqrt.pop %v208
      %v241 = vrsqrt.pop %v209
      %v242 = vrsqrt.pop %v210
      %v243 = vrsqrt.pop %v211
      %v244 = vrsqrt.pop %v212
      %v245 = vrsqrt.pop %v213
      %v246 = vrsqrt.pop %v214
      %v247 = vmul.f32 %v22, %v215
      %v248 = vmul.f32 %v23, %v216
      %v249 = vmul.f32 %v24, %v217
      %v250 = vmul.f32 %v25, %v218
      %v251 = vmul.f32 %v26, %v219
      %v252 = vmul.f32 %v27, %v220
      %v253 = vmul.f32 %v28, %v221
      %v254 = vmul.f32 %v29, %v222
      %v255 = vmul.f32 %v30, %v223
      %v256 = vmul.f32 %v31, %v224
      %v257 = vmul.f32 %v32, %v225
      %v258 = vmul.f32 %v33, %v226
      %v259 = vmul.f32 %v34, %v227
      %v260 = vmul.f32 %v35, %v228
      %v261 = vmul.f32 %v36, %v229
      %v262 = vmul.f32 %v37, %v230
      %v263 = vmul.f32 %v38, %v231
      %v264 = vmul.f32 %v39, %v232
      %v265 = vmul.f32 %v40, %v233
      %v266 = vmul.f32 %v41, %v234
      %v267 = vmul.f32 %v42, %v235
      %v268 = vmul.f32 %v43, %v236
      %v269 = vmul.f32 %v44, %v237
      %v270 = vmul.f32 %v45, %v238
      %v271 = vmul.f32 %v46, %v239
      %v272 = vmul.f32 %v47, %v240
      %v273 = vmul.f32 %v48, %v241
      %v274 = vmul.f32 %v49, %v242
      %v275 = vmul.f32 %v50, %v243
      %v276 = vmul.f32 %v51, %v244
      %v277 = vmul.f32 %v52, %v245
      %v278 = vmul.f32 %v53, %v246
      %279 = vst.msk [vmem:[#allocation2] sm:$0xff] %vm86, %v247
      %280 = vst.msk [vmem:[#allocation2 + $0x8] sm:$0xff] %vm86, %v248
      %281 = vst.msk [vmem:[#allocation2 + $0x10] sm:$0xff] %vm86, %v249
      %282 = vst.msk [vmem:[#allocation2 + $0x18] sm:$0xff] %vm86, %v250
      %283 = vst.msk [vmem:[#allocation2 + $0x20] sm:$0xff] %vm86, %v251
      %284 = vst.msk [vmem:[#allocation2 + $0x28] sm:$0xff] %vm86, %v252
      %285 = vst.msk [vmem:[#allocation2 + $0x30] sm:$0xff] %vm86, %v253
      %286 = vst.msk [vmem:[#allocation2 + $0x38] sm:$0xff] %vm86, %v254
      %287 = vst.msk [vmem:[#allocation2 + $0x40] sm:$0xff] %vm86, %v255
      %288 = vst.msk [vmem:[#allocation2 + $0x48] sm:$0xff] %vm86, %v256
      %289 = vst.msk [vmem:[#allocation2 + $0x50] sm:$0xff] %vm86, %v257
      %290 = vst.msk [vmem:[#allocation2 + $0x58] sm:$0xff] %vm86, %v258
      %291 = vst.msk [vmem:[#allocation2 + $0x60] sm:$0xff] %vm86, %v259
      %292 = vst.msk [vmem:[#allocation2 + $0x68] sm:$0xff] %vm86, %v260
      %293 = vst.msk [vmem:[#allocation2 + $0x70] sm:$0xff] %vm86, %v261
      %294 = vst.msk [vmem:[#allocation2 + $0x78] sm:$0xff] %vm86, %v262
      %295 = vst.msk [vmem:[#allocation2 + $0x80] sm:$0xff] %vm86, %v263
      %296 = vst.msk [vmem:[#allocation2 + $0x88] sm:$0xff] %vm86, %v264
      %297 = vst.msk [vmem:[#allocation2 + $0x90] sm:$0xff] %vm86, %v265
      %298 = vst.msk [vmem:[#allocation2 + $0x98] sm:$0xff] %vm86, %v266
      %299 = vst.msk [vmem:[#allocation2 + $0xa0] sm:$0xff] %vm86, %v267
      %300 = vst.msk [vmem:[#allocation2 + $0xa8] sm:$0xff] %vm86, %v268
      %301 = vst.msk [vmem:[#allocation2 + $0xb0] sm:$0xff] %vm86, %v269
      %302 = vst.msk [vmem:[#allocation2 + $0xb8] sm:$0xff] %vm86, %v270
      %303 = vst.msk [vmem:[#allocation2 + $0xc0] sm:$0xff] %vm86, %v271
      %304 = vst.msk [vmem:[#allocation2 + $0xc8] sm:$0xff] %vm86, %v272
      %305 = vst.msk [vmem:[#allocation2 + $0xd0] sm:$0xff] %vm86, %v273
      %306 = vst.msk [vmem:[#allocation2 + $0xd8] sm:$0xff] %vm86, %v274
      %307 = vst.msk [vmem:[#allocation2 + $0xe0] sm:$0xff] %vm86, %v275
      %308 = vst.msk [vmem:[#allocation2 + $0xe8] sm:$0xff] %vm86, %v276
      %309 = vst.msk [vmem:[#allocation2 + $0xf0] sm:$0xff] %vm86, %v277
      %310 = vst.msk [vmem:[#allocation2 + $0xf8] sm:$0xff] %vm86, %v278
    $region17: #{tpu_custom_call.1} parent=1 // pred_fallthru
      _
    %v311 = vld [vmem:[%s0] sm:$0xff]
    %v312 = vld [vmem:[%s0 + $0x8] sm:$0xff]
    %v313 = vmul.f32 %v311, %v311
    %v314 = vmul.f32 %v312, %v312
    %vm315 = vcmask 261120
    %v316 = vsel %vm315, %v313, 0.0
    %317 = vadd.xlane.f32.xlu0 %v316
    %v318 = vpop.xlane.xlu0 %317
    %v319 = vsel %vm315, %v314, 0.0
    %320 = vadd.xlane.f32.xlu0 %v319
    %v321 = vpop.xlane.xlu0 %320
    %v322 = vmax.f32 %v318, 1e-24
    %v323 = vmax.f32 %v321, 1e-24
    %v324 = vrsqrt.pop %v322
    %v325 = vrsqrt.pop %v323
    %v326 = vmul.f32 %v311, %v324
    %v327 = vmul.f32 %v312, %v325
    %v328 = vld [vmem:[#allocation2] sm:$0xff]
    %v329 = vld [vmem:[#allocation2 + $0x8] sm:$0xff]
    %v330 = vld [vmem:[#allocation2 + $0x10] sm:$0xff]
    %v331 = vld [vmem:[#allocation2 + $0x18] sm:$0xff]
    %v332 = vld [vmem:[#allocation2 + $0x20] sm:$0xff]
    %v333 = vld [vmem:[#allocation2 + $0x28] sm:$0xff]
    %v334 = vld [vmem:[#allocation2 + $0x30] sm:$0xff]
    %v335 = vld [vmem:[#allocation2 + $0x38] sm:$0xff]
    %v336 = vld [vmem:[#allocation2 + $0x40] sm:$0xff]
    %v337 = vld [vmem:[#allocation2 + $0x48] sm:$0xff]
    %v338 = vld [vmem:[#allocation2 + $0x50] sm:$0xff]
    %v339 = vld [vmem:[#allocation2 + $0x58] sm:$0xff]
    %v340 = vld [vmem:[#allocation2 + $0x60] sm:$0xff]
    %v341 = vld [vmem:[#allocation2 + $0x68] sm:$0xff]
    %v342 = vld [vmem:[#allocation2 + $0x70] sm:$0xff]
    %v343 = vld [vmem:[#allocation2 + $0x78] sm:$0xff]
    %v344 = vld [vmem:[#allocation2 + $0x80] sm:$0xff]
    %v345 = vld [vmem:[#allocation2 + $0x88] sm:$0xff]
    %v346 = vld [vmem:[#allocation2 + $0x90] sm:$0xff]
    %v347 = vld [vmem:[#allocation2 + $0x98] sm:$0xff]
    %v348 = vld [vmem:[#allocation2 + $0xa0] sm:$0xff]
    %v349 = vld [vmem:[#allocation2 + $0xa8] sm:$0xff]
    %v350 = vld [vmem:[#allocation2 + $0xb0] sm:$0xff]
    %v351 = vld [vmem:[#allocation2 + $0xb8] sm:$0xff]
    %v352 = vld [vmem:[#allocation2 + $0xc0] sm:$0xff]
    %v353 = vld [vmem:[#allocation2 + $0xc8] sm:$0xff]
    %v354 = vld [vmem:[#allocation2 + $0xd0] sm:$0xff]
    %v355 = vld [vmem:[#allocation2 + $0xd8] sm:$0xff]
    %v356 = vld [vmem:[#allocation2 + $0xe0] sm:$0xff]
    %v357 = vld [vmem:[#allocation2 + $0xe8] sm:$0xff]
    %v358 = vld [vmem:[#allocation2 + $0xf0] sm:$0xff]
    %v359 = vld [vmem:[#allocation2 + $0xf8] sm:$0xff]
    %v361 = vsel %vm315, %v326, 0
    %v364 = vsel %vm315, %v328, 0
    %v367 = vsel %vm315, %v329, 0
    %v370 = vsel %vm315, %v330, 0
    %v373 = vsel %vm315, %v331, 0
    %v376 = vsel %vm315, %v332, 0
    %v379 = vsel %vm315, %v333, 0
    %v382 = vsel %vm315, %v334, 0
    %v385 = vsel %vm315, %v335, 0
    %v388 = vsel %vm315, %v336, 0
    %v391 = vsel %vm315, %v337, 0
    %v394 = vsel %vm315, %v338, 0
    %v397 = vsel %vm315, %v339, 0
    %v400 = vsel %vm315, %v340, 0
    %v403 = vsel %vm315, %v341, 0
    %v406 = vsel %vm315, %v342, 0
    %v409 = vsel %vm315, %v343, 0
    %411 = vmatprep.subr.mxu0 0.0
    %412 = vmatpush1.xpose.msra.mxu0 %v364
    %413 = vmatprep.subr.mxu0 0.0
    %414 = vmatpush1.xpose.msra.mxu0 %v367
    %415 = vmatprep.subr.mxu0 0.0
    %416 = vmatpush1.xpose.msra.mxu0 %v370
    %417 = vmatprep.subr.mxu0 0.0
    %418 = vmatpush1.xpose.msra.mxu0 %v373
    %419 = vmatprep.subr.mxu0 0.0
    %420 = vmatpush1.xpose.msra.mxu0 %v376
    %421 = vmatprep.subr.mxu0 0.0
    %422 = vmatpush1.xpose.msra.mxu0 %v379
    %423 = vmatprep.subr.mxu0 0.0
    %424 = vmatpush1.xpose.msra.mxu0 %v382
    %425 = vmatprep.subr.mxu0 0.0
    %426 = vmatpush1.xpose.msra.mxu0 %v385
    %427 = vmatprep.subr.mxu0 0.0
    %428 = vmatpush1.xpose.msra.mxu0 %v388
    %429 = vmatprep.subr.mxu0 0.0
    %430 = vmatpush1.xpose.msra.mxu0 %v391
    %431 = vmatprep.subr.mxu0 0.0
    %432 = vmatpush1.xpose.msra.mxu0 %v394
    %433 = vmatprep.subr.mxu0 0.0
    %434 = vmatpush1.xpose.msra.mxu0 %v397
    %435 = vmatprep.subr.mxu0 0.0
    %436 = vmatpush1.xpose.msra.mxu0 %v400
    %437 = vmatprep.subr.mxu0 0.0
    %438 = vmatpush1.xpose.msra.mxu0 %v403
    %439 = vmatprep.subr.mxu0 0.0
    %440 = vmatpush1.xpose.msra.mxu0 %v406
    %441 = vmatprep.subr.mxu0 0.0
    %442 = vmatpush1.xpose.msra.mxu0 %v409
    %443 = vmatprep.subr.mxu0 0.0
    %444 = vmatpush1.xpose.msra.mxu0 0.0
    %445 = vmatprep.subr.mxu0 0.0
    %446 = vmatpush1.xpose.msra.mxu0 0.0
    %447 = vmatprep.subr.mxu0 0.0
    %448 = vmatpush1.xpose.msra.mxu0 0.0
    %449 = vmatprep.subr.mxu0 0.0
    %450 = vmatpush1.xpose.msra.mxu0 0.0
    %451 = vmatprep.subr.mxu0 0.0
    %452 = vmatpush1.xpose.msra.mxu0 0.0
    %453 = vmatprep.subr.mxu0 0.0
    %454 = vmatpush1.xpose.msra.mxu0 0.0
    %455 = vmatprep.subr.mxu0 0.0
    %456 = vmatpush1.xpose.msra.mxu0 0.0
    %457 = vmatprep.subr.mxu0 0.0
    %458 = vmatpush1.xpose.msra.mxu0 0.0
    %459 = vmatprep.subr.mxu0 0.0
    %460 = vmatpush1.xpose.msra.mxu0 0.0
    %461 = vmatprep.subr.mxu0 0.0
    %462 = vmatpush1.xpose.msra.mxu0 0.0
    %463 = vmatprep.subr.mxu0 0.0
    %464 = vmatpush1.xpose.msra.mxu0 0.0
    %465 = vmatprep.subr.mxu0 0.0
    %466 = vmatpush1.xpose.msra.mxu0 0.0
    %467 = vmatprep.subr.mxu0 0.0
    %468 = vmatpush1.xpose.msra.mxu0 0.0
    %469 = vmatprep.subr.mxu0 0.0
    %470 = vmatpush1.xpose.msra.mxu0 0.0
    %471 = vmatprep.subr.mxu0 0.0
    %472 = vmatpush1.xpose.msra.mxu0 0.0
    %473 = vmatprep.subr.mxu0 0.0
    %474 = vmatpush1.xpose.msra.mxu0 0.0
    %475 = vmatprep.mubr.f32.mxu0 0.0
    %476 = vmatmul.mubr.f32.gmra.mrb[0].mxu0 %v361
    %v477 = vpop.f32.mrb[0].mxu0
    %v478 = vadd.f32 1.0, %v477
    %v479 = vpop.f32.mrb[0].mxu0
    %480 = vdwg.mxu0
    %v482 = vsel %vm315, %v327, 0
    %v485 = vsel %vm315, %v344, 0
    %v488 = vsel %vm315, %v345, 0
    %v491 = vsel %vm315, %v346, 0
    %v494 = vsel %vm315, %v347, 0
    %v497 = vsel %vm315, %v348, 0
    %v500 = vsel %vm315, %v349, 0
    %v503 = vsel %vm315, %v350, 0
    %v506 = vsel %vm315, %v351, 0
    %v509 = vsel %vm315, %v352, 0
    %v512 = vsel %vm315, %v353, 0
    %v515 = vsel %vm315, %v354, 0
    %v518 = vsel %vm315, %v355, 0
    %v521 = vsel %vm315, %v356, 0
    %v524 = vsel %vm315, %v357, 0
    %v527 = vsel %vm315, %v358, 0
    %v530 = vsel %vm315, %v359, 0
    %532 = vmatprep.subr.mxu0 0.0
    %533 = vmatpush1.xpose.msra.mxu0 %v485
    %534 = vmatprep.subr.mxu0 0.0
    %535 = vmatpush1.xpose.msra.mxu0 %v488
    %536 = vmatprep.subr.mxu0 0.0
    %537 = vmatpush1.xpose.msra.mxu0 %v491
    %538 = vmatprep.subr.mxu0 0.0
    %539 = vmatpush1.xpose.msra.mxu0 %v494
    %540 = vmatprep.subr.mxu0 0.0
    %541 = vmatpush1.xpose.msra.mxu0 %v497
    %542 = vmatprep.subr.mxu0 0.0
    %543 = vmatpush1.xpose.msra.mxu0 %v500
    %544 = vmatprep.subr.mxu0 0.0
    %545 = vmatpush1.xpose.msra.mxu0 %v503
    %546 = vmatprep.subr.mxu0 0.0
    %547 = vmatpush1.xpose.msra.mxu0 %v506
    %548 = vmatprep.subr.mxu0 0.0
    %549 = vmatpush1.xpose.msra.mxu0 %v509
    %550 = vmatprep.subr.mxu0 0.0
    %551 = vmatpush1.xpose.msra.mxu0 %v512
    %552 = vmatprep.subr.mxu0 0.0
    %553 = vmatpush1.xpose.msra.mxu0 %v515
    %554 = vmatprep.subr.mxu0 0.0
    %555 = vmatpush1.xpose.msra.mxu0 %v518
    %556 = vmatprep.subr.mxu0 0.0
    %557 = vmatpush1.xpose.msra.mxu0 %v521
    %558 = vmatprep.subr.mxu0 0.0
    %559 = vmatpush1.xpose.msra.mxu0 %v524
    %560 = vmatprep.subr.mxu0 0.0
    %561 = vmatpush1.xpose.msra.mxu0 %v527
    %562 = vmatprep.subr.mxu0 0.0
    %563 = vmatpush1.xpose.msra.mxu0 %v530
    %564 = vmatprep.subr.mxu0 0.0
    %565 = vmatpush1.xpose.msra.mxu0 0.0
    %566 = vmatprep.subr.mxu0 0.0
    %567 = vmatpush1.xpose.msra.mxu0 0.0
    %568 = vmatprep.subr.mxu0 0.0
    %569 = vmatpush1.xpose.msra.mxu0 0.0
    %570 = vmatprep.subr.mxu0 0.0
    %571 = vmatpush1.xpose.msra.mxu0 0.0
    %572 = vmatprep.subr.mxu0 0.0
    %573 = vmatpush1.xpose.msra.mxu0 0.0
    %574 = vmatprep.subr.mxu0 0.0
    %575 = vmatpush1.xpose.msra.mxu0 0.0
    %576 = vmatprep.subr.mxu0 0.0
    %577 = vmatpush1.xpose.msra.mxu0 0.0
    %578 = vmatprep.subr.mxu0 0.0
    %579 = vmatpush1.xpose.msra.mxu0 0.0
    %580 = vmatprep.subr.mxu0 0.0
    %581 = vmatpush1.xpose.msra.mxu0 0.0
    %582 = vmatprep.subr.mxu0 0.0
    %583 = vmatpush1.xpose.msra.mxu0 0.0
    %584 = vmatprep.subr.mxu0 0.0
    %585 = vmatpush1.xpose.msra.mxu0 0.0
    %586 = vmatprep.subr.mxu0 0.0
    %587 = vmatpush1.xpose.msra.mxu0 0.0
    %588 = vmatprep.subr.mxu0 0.0
    %589 = vmatpush1.xpose.msra.mxu0 0.0
    %590 = vmatprep.subr.mxu0 0.0
    %591 = vmatpush1.xpose.msra.mxu0 0.0
    %592 = vmatprep.subr.mxu0 0.0
    %593 = vmatpush1.xpose.msra.mxu0 0.0
    %594 = vmatprep.subr.mxu0 0.0
    %595 = vmatpush1.xpose.msra.mxu0 0.0
    %596 = vmatprep.mubr.f32.mxu0 0.0
    %597 = vmatmul.mubr.f32.gmra.mrb[0].mxu0 %v482
    %v598 = vpop.f32.mrb[0].mxu0
    %v599 = vadd.f32 1.0, %v598
    %v600 = vpop.f32.mrb[0].mxu0
    %601 = vdwg.mxu0
    %v602 = vlaneseq
    %v603 = vand.u32 %v602, 127
    %vm604 = vcmp.lt.s32.totalorder %v603, 8
    %v605 = vsel %vm604, 1, 0
    %vm606 = vcmp.eq.s32.totalorder %v605, 1
    %v607 = vsel %vm606, %v478, 0.0
    %v608 = vsel %vm606, %v599, 0.0
    %609 = vadd.xlane.f32.xlu0 %v607
    %v610 = vpop.xlane.xlu0 %609
    %611 = vadd.xlane.f32.xlu0 %v608
    %v612 = vpop.xlane.xlu0 %611
    %v613 = vmax.f32 %v610, 1e-12
    %v614 = vmax.f32 %v612, 1e-12
    %v615 = vrcp.pop %v613
    %v616 = vrcp.pop %v614
    %v617 = vmul.f32 %v607, %v615
    %v618 = vmul.f32 %v608, %v616
    %v619 = vld [vmem:[%s2] sm:$0xff]
    %v620 = vld [vmem:[%s2 + $0x8] sm:$0xff]
    %v621 = vld [vmem:[%s2 + $0x10] sm:$0xff]
    %v622 = vld [vmem:[%s2 + $0x18] sm:$0xff]
    %v623 = vld [vmem:[%s2 + $0x20] sm:$0xff]
    %v624 = vld [vmem:[%s2 + $0x28] sm:$0xff]
    %v625 = vld [vmem:[%s2 + $0x30] sm:$0xff]
    %v626 = vld [vmem:[%s2 + $0x38] sm:$0xff]
    %v627 = vld [vmem:[%s2 + $0x40] sm:$0xff]
    %v628 = vld [vmem:[%s2 + $0x48] sm:$0xff]
    %v629 = vld [vmem:[%s2 + $0x50] sm:$0xff]
    %v630 = vld [vmem:[%s2 + $0x58] sm:$0xff]
    %v631 = vld [vmem:[%s2 + $0x60] sm:$0xff]
    %v632 = vld [vmem:[%s2 + $0x68] sm:$0xff]
    %v633 = vld [vmem:[%s2 + $0x70] sm:$0xff]
    %v634 = vld [vmem:[%s2 + $0x78] sm:$0xff]
    %v635 = vld [vmem:[%s2 + $0x80] sm:$0xff]
    %v636 = vld [vmem:[%s2 + $0x88] sm:$0xff]
    %v637 = vld [vmem:[%s2 + $0x90] sm:$0xff]
    %v638 = vld [vmem:[%s2 + $0x98] sm:$0xff]
    %v639 = vld [vmem:[%s2 + $0xa0] sm:$0xff]
    %v640 = vld [vmem:[%s2 + $0xa8] sm:$0xff]
    %v641 = vld [vmem:[%s2 + $0xb0] sm:$0xff]
    %v642 = vld [vmem:[%s2 + $0xb8] sm:$0xff]
    %v643 = vld [vmem:[%s2 + $0xc0] sm:$0xff]
    %v644 = vld [vmem:[%s2 + $0xc8] sm:$0xff]
    %v645 = vld [vmem:[%s2 + $0xd0] sm:$0xff]
    %v646 = vld [vmem:[%s2 + $0xd8] sm:$0xff]
    %v647 = vld [vmem:[%s2 + $0xe0] sm:$0xff]
    %v648 = vld [vmem:[%s2 + $0xe8] sm:$0xff]
    %v649 = vld [vmem:[%s2 + $0xf0] sm:$0xff]
    %v650 = vld [vmem:[%s2 + $0xf8] sm:$0xff]
    %651 = vmatprep.subr.mxu0 0.0
    %652 = vmatpush1.msra.mxu0 %v619
    %653 = vmatprep.subr.mxu0 0.0
    %654 = vmatpush1.msra.mxu0 %v620
    %655 = vmatprep.subr.mxu0 0.0
    %656 = vmatpush1.msra.mxu0 %v621
    %657 = vmatprep.subr.mxu0 0.0
    %658 = vmatpush1.msra.mxu0 %v622
    %659 = vmatprep.subr.mxu0 0.0
    %660 = vmatpush1.msra.mxu0 %v623
    %661 = vmatprep.subr.mxu0 0.0
    %662 = vmatpush1.msra.mxu0 %v624
    %663 = vmatprep.subr.mxu0 0.0
    %664 = vmatpush1.msra.mxu0 %v625
    %665 = vmatprep.subr.mxu0 0.0
    %666 = vmatpush1.msra.mxu0 %v626
    %667 = vmatprep.subr.mxu0 0.0
    %668 = vmatpush1.msra.mxu0 %v627
    %669 = vmatprep.subr.mxu0 0.0
    %670 = vmatpush1.msra.mxu0 %v628
    %671 = vmatprep.subr.mxu0 0.0
    %672 = vmatpush1.msra.mxu0 %v629
    %673 = vmatprep.subr.mxu0 0.0
    %674 = vmatpush1.msra.mxu0 %v630
    %675 = vmatprep.subr.mxu0 0.0
    %676 = vmatpush1.msra.mxu0 %v631
    %677 = vmatprep.subr.mxu0 0.0
    %678 = vmatpush1.msra.mxu0 %v632
    %679 = vmatprep.subr.mxu0 0.0
    %680 = vmatpush1.msra.mxu0 %v633
    %681 = vmatprep.subr.mxu0 0.0
    %682 = vmatpush1.msra.mxu0 %v634
    %683 = vmatprep.subr.mxu0 0.0
    %684 = vmatpush1.msra.mxu0 0.0
    %685 = vmatprep.subr.mxu0 0.0
    %686 = vmatpush1.msra.mxu0 0.0
    %687 = vmatprep.subr.mxu0 0.0
    %688 = vmatpush1.msra.mxu0 0.0
    %689 = vmatprep.subr.mxu0 0.0
    %690 = vmatpush1.msra.mxu0 0.0
    %691 = vmatprep.subr.mxu0 0.0
    %692 = vmatpush1.msra.mxu0 0.0
    %693 = vmatprep.subr.mxu0 0.0
    %694 = vmatpush1.msra.mxu0 0.0
    %695 = vmatprep.subr.mxu0 0.0
    %696 = vmatpush1.msra.mxu0 0.0
    %697 = vmatprep.subr.mxu0 0.0
    %698 = vmatpush1.msra.mxu0 0.0
    %699 = vmatprep.subr.mxu0 0.0
    %700 = vmatpush1.msra.mxu0 0.0
    %701 = vmatprep.subr.mxu0 0.0
    %702 = vmatpush1.msra.mxu0 0.0
    %703 = vmatprep.subr.mxu0 0.0
    %704 = vmatpush1.msra.mxu0 0.0
    %705 = vmatprep.subr.mxu0 0.0
    %706 = vmatpush1.msra.mxu0 0.0
    %707 = vmatprep.subr.mxu0 0.0
    %708 = vmatpush1.msra.mxu0 0.0
    %709 = vmatprep.subr.mxu0 0.0
    %710 = vmatpush1.msra.mxu0 0.0
    %711 = vmatprep.subr.mxu0 0.0
    %712 = vmatpush1.msra.mxu0 0.0
    %713 = vmatprep.subr.mxu0 0.0
    %714 = vmatpush1.msra.mxu0 0.0
    %715 = vmatprep.mubr.f32.mxu0 0.0
    %716 = vmatmul.mubr.f32.gmra.mrb[0].mxu0 %v617
    %v717 = vpop.f32.mrb[0].mxu0
    %v718 = vadd.f32 0.0, %v717
    %v719 = vpop.f32.mrb[0].mxu0
    %720 = vdwg.mxu0
    %721 = vmatprep.subr.mxu0 0.0
    %722 = vmatpush1.msra.mxu0 %v635
    %723 = vmatprep.subr.mxu0 0.0
    %724 = vmatpush1.msra.mxu0 %v636
    %725 = vmatprep.subr.mxu0 0.0
    %726 = vmatpush1.msra.mxu0 %v637
    %727 = vmatprep.subr.mxu0 0.0
    %728 = vmatpush1.msra.mxu0 %v638
    %729 = vmatprep.subr.mxu0 0.0
    %730 = vmatpush1.msra.mxu0 %v639
    %731 = vmatprep.subr.mxu0 0.0
    %732 = vmatpush1.msra.mxu0 %v640
    %733 = vmatprep.subr.mxu0 0.0
    %734 = vmatpush1.msra.mxu0 %v641
    %735 = vmatprep.subr.mxu0 0.0
    %736 = vmatpush1.msra.mxu0 %v642
    %737 = vmatprep.subr.mxu0 0.0
    %738 = vmatpush1.msra.mxu0 %v643
    %739 = vmatprep.subr.mxu0 0.0
    %740 = vmatpush1.msra.mxu0 %v644
    %741 = vmatprep.subr.mxu0 0.0
    %742 = vmatpush1.msra.mxu0 %v645
    %743 = vmatprep.subr.mxu0 0.0
    %744 = vmatpush1.msra.mxu0 %v646
    %745 = vmatprep.subr.mxu0 0.0
    %746 = vmatpush1.msra.mxu0 %v647
    %747 = vmatprep.subr.mxu0 0.0
    %748 = vmatpush1.msra.mxu0 %v648
    %749 = vmatprep.subr.mxu0 0.0
    %750 = vmatpush1.msra.mxu0 %v649
    %751 = vmatprep.subr.mxu0 0.0
    %752 = vmatpush1.msra.mxu0 %v650
    %753 = vmatprep.subr.mxu0 0.0
    %754 = vmatpush1.msra.mxu0 0.0
    %755 = vmatprep.subr.mxu0 0.0
    %756 = vmatpush1.msra.mxu0 0.0
    %757 = vmatprep.subr.mxu0 0.0
    %758 = vmatpush1.msra.mxu0 0.0
    %759 = vmatprep.subr.mxu0 0.0
    %760 = vmatpush1.msra.mxu0 0.0
    %761 = vmatprep.subr.mxu0 0.0
    %762 = vmatpush1.msra.mxu0 0.0
    %763 = vmatprep.subr.mxu0 0.0
    %764 = vmatpush1.msra.mxu0 0.0
    %765 = vmatprep.subr.mxu0 0.0
    %766 = vmatpush1.msra.mxu0 0.0
    %767 = vmatprep.subr.mxu0 0.0
    %768 = vmatpush1.msra.mxu0 0.0
    %769 = vmatprep.subr.mxu0 0.0
    %770 = vmatpush1.msra.mxu0 0.0
    %771 = vmatprep.subr.mxu0 0.0
    %772 = vmatpush1.msra.mxu0 0.0
    %773 = vmatprep.subr.mxu0 0.0
    %774 = vmatpush1.msra.mxu0 0.0
    %775 = vmatprep.subr.mxu0 0.0
    %776 = vmatpush1.msra.mxu0 0.0
    %777 = vmatprep.subr.mxu0 0.0
    %778 = vmatpush1.msra.mxu0 0.0
    %779 = vmatprep.subr.mxu0 0.0
    %780 = vmatpush1.msra.mxu0 0.0
    %781 = vmatprep.subr.mxu0 0.0
    %782 = vmatpush1.msra.mxu0 0.0
    %783 = vmatprep.subr.mxu0 0.0
    %784 = vmatpush1.msra.mxu0 0.0
    %785 = vmatprep.mubr.f32.mxu0 0.0
    %786 = vmatmul.mubr.f32.gmra.mrb[0].mxu0 %v618
    %v787 = vpop.f32.mrb[0].mxu0
    %v788 = vadd.f32 0.0, %v787
    %v789 = vpop.f32.mrb[0].mxu0
    %790 = vdwg.mxu0
    %791 = vst [vmem:[#allocation3] sm:$0xff] %v718
    %792 = vst [vmem:[#allocation3 + $0x8] sm:$0xff] %v788
    %793 = vst [vmem:[#allocation5] sm:$0xff] %v617
    %794 = vst [vmem:[#allocation5 + $0x8] sm:$0xff] %v618
    // Predicated region
    $region18: #{tpu_custom_call.1} parent=1 // pred_check
      _
    $region19: #{tpu_custom_call.1} parent=1 // pred_check_branch
      %796 = sbr.rel (0) target = $region21
    $region20: #{tpu_custom_call.1} parent=1 // pred_region
      %s798 = ssub.s32 256, 256
      %799 = vsyncadd [#allocation4], %s798
      %s800 = sshll.u32 [#allocation3], 4
      %s801 = int_to_ptr.vmem [resolvable:$true] %s800
      %806 = dma.vmem_to_hbm [thread:$0]  %s801, 256, %s3, [#allocation4], 128, 128, 8
    $region21: #{tpu_custom_call.1} parent=1 // pred_fallthru
      _
    // Predicated region
    $region22: #{tpu_custom_call.1} parent=1 // pred_check
      _
    $region23: #{tpu_custom_call.1} parent=1 // pred_check_branch
      %808 = sbr.rel (0) target = $region25
    $region24: #{tpu_custom_call.1} parent=1 // pred_region
      %s810 = ssub.s32 256, 256
      %811 = vsyncadd [#allocation6], %s810
      %s812 = sshll.u32 [#allocation5], 4
      %s813 = int_to_ptr.vmem [resolvable:$true] %s812
      %818 = dma.vmem_to_hbm [thread:$0]  %s813, 256, %s4, [#allocation6], 128, 128, 8
    $region25: #{tpu_custom_call.1} parent=1 // pred_fallthru
      _
    // Predicated region
    $region26: #{tpu_custom_call.1} parent=1 // pred_check
      _
    $region27: #{tpu_custom_call.1} parent=1 // pred_check_branch
      %820 = sbr.rel (0) target = $region29
    $region28: #{tpu_custom_call.1} parent=1 // pred_region
      %821 = dma.done [#allocation4], 256
    $region29: #{tpu_custom_call.1} parent=1 // pred_fallthru
      _
    // Predicated region
    $region30: #{tpu_custom_call.1} parent=1 // pred_check
      _
    $region31: #{tpu_custom_call.1} parent=1 // pred_check_branch
      %823 = sbr.rel (0) target = $region33
    $region32: #{tpu_custom_call.1} parent=1 // pred_region
      %824 = dma.done [#allocation6], 256
    $region33: #{tpu_custom_call.1} parent=1 // pred_fallthru
      _
    %825 = vsyncpa [#allocation4], 1
    %826 = vsyncpa [#allocation6], 1

</llo_original>
